<compile_context>
chip_gen: v6e
topology: v6e:2x2x1
jax: 0.10.0
libtpu: 0.0.40
codegen_flags: <defaults>
</compile_context>

<pallas_src>
import jax
import jax.numpy as jnp
from jax.experimental import pallas as pl
from jax.experimental.pallas import tpu as pltpu

_BN_EPS = 1e-5
_LN_EPS = 1e-5
_SUB = 8  # sublane packing factor


# ------------------------------ fused kernel -----------------------------------
def _fused_submodel_kernel(scal_ref, x_ref, lnw_ref, lnb_ref, o_ref):
    """conv(1x1)+BN(eval) folded affine -> ReLU -> [conv1 folded into LN] -> LayerNorm.

    scal_ref: SMEM (3,)       f32 = [alpha, beta, a2]  (conv1 bias b2 cancels in LN)
    x_ref:    VMEM (TB,S,L)   f32 activations, sublane-dense, L % 128 == 0
    lnw_ref:  VMEM (1,S,L)    f32 LayerNorm weight (reshaped)
    lnb_ref:  VMEM (1,S,L)    f32 LayerNorm bias   (reshaped)
    o_ref:    VMEM (TB,S,L)   f32
    """
    alpha = scal_ref[0]
    beta = scal_ref[1]
    a2 = scal_ref[2]

    x = x_ref[...]                                   # (TB, S, L)
    # conv (1x1, 1ch) + BatchNorm (eval) folded affine; QuantStub = identity; ReLU.
    y = jnp.maximum(alpha * x + beta, 0.0)

    # One-pass LayerNorm statistics over all D = S*L elements of each sample.
    inv_n = 1.0 / (y.shape[1] * y.shape[2])
    s1 = jnp.sum(y, axis=-1, keepdims=True)          # lane reduce   -> (TB, S, 1)
    s2 = jnp.sum(y * y, axis=-1, keepdims=True)
    s1 = jnp.sum(s1, axis=1, keepdims=True)          # sublane reduce -> (TB, 1, 1)
    s2 = jnp.sum(s2, axis=1, keepdims=True)
    mean = s1 * inv_n
    var = jnp.maximum(s2 * inv_n - mean * mean, 0.0)

    # conv1 (z = a2*y + b2; DeQuantStub = identity) folded exactly through LN:
    #   LN(z) = a2 * (y - mean_y) * rsqrt(a2^2 * var_y + eps)   (b2 cancels)
    scale = a2 * jax.lax.rsqrt(a2 * a2 * var + _LN_EPS)
    o_ref[...] = (y - mean) * scale * lnw_ref[...] + lnb_ref[...]


# --------------------------- one-time param folding -----------------------------
def prepare_params(raw):
    """Fold conv+BN into one affine, flatten/pack LN params (off the hot path)."""
    s = raw["bn_gamma"] / jnp.sqrt(raw["bn_var"] + _BN_EPS)
    alpha = s * raw["conv_w"]
    beta = s * (raw["conv_b"] - raw["bn_mean"]) + raw["bn_beta"]
    # conv1 bias cancels inside LayerNorm, only its weight (a2) is needed.
    scal = jnp.stack([alpha, beta, raw["conv1_w"]]).astype(jnp.float32)

    d = raw["ln_weight"].size
    sub = _SUB if d % (_SUB * 128) == 0 else 1       # sublane-dense when possible
    l = d // sub
    return {
        "scal": scal,
        "ln_w": raw["ln_weight"].reshape(1, sub, l).astype(jnp.float32),
        "ln_b": raw["ln_bias"].reshape(1, sub, l).astype(jnp.float32),
    }


# -------------------------------- forward --------------------------------------
def submodel_forward(x, prepped):
    B, C, H, W = x.shape
    sub = prepped["ln_w"].shape[1]
    L = prepped["ln_w"].shape[2]
    assert C * H * W == sub * L
    x3 = x.reshape(B, sub, L)                        # sublane-dense packing
    TB = 1                                           # one sample per pipelined step

    out = pl.pallas_call(
        _fused_submodel_kernel,
        out_shape=jax.ShapeDtypeStruct((B, sub, L), jnp.float32),
        grid=(B // TB,),
        in_specs=[
            pl.BlockSpec(memory_space=pltpu.MemorySpace.SMEM),       # folded scalars
            pl.BlockSpec((TB, sub, L), lambda b: (b, 0, 0)),         # activations
            pl.BlockSpec((1, sub, L), lambda b: (0, 0, 0)),          # LN weight (resident)
            pl.BlockSpec((1, sub, L), lambda b: (0, 0, 0)),          # LN bias   (resident)
        ],
        out_specs=pl.BlockSpec((TB, sub, L), lambda b: (b, 0, 0)),
        compiler_params=pltpu.CompilerParams(
            dimension_semantics=("parallel",)),
    )(prepped["scal"], x3, prepped["ln_w"], prepped["ln_b"])
    return out.reshape(B, C, H, W)


# ------------------------------ pure-JAX reference -------------------------------
def reference_forward(x, raw):
    y = raw["conv_w"] * x + raw["conv_b"]
    y = (y - raw["bn_mean"]) * raw["bn_gamma"] / jnp.sqrt(raw["bn_var"] + _BN_EPS) \
        + raw["bn_beta"]
    y = jnp.maximum(y, 0.0)
    y = raw["conv1_w"] * y + raw["conv1_b"]
    mean = jnp.mean(y, axis=(1, 2, 3), keepdims=True)
    var = jnp.mean(jnp.square(y - mean), axis=(1, 2, 3), keepdims=True)
    return (y - mean) / jnp.sqrt(var + _LN_EPS) * raw["ln_weight"][None] \
        + raw["ln_bias"][None]


# ----------------------------------- main ---------------------------------------
if __name__ == "__main__":
    # LayerNorm([1, 224, 224]) fixes (C, H, W); batch kept small.
    B, C, H, W = 2, 1, 224, 224

    key = jax.random.PRNGKey(0)
    ks = jax.random.split(key, 11)

    raw = {
        # Conv2d(1, 1, 1): weight (1,1,1,1), bias (1,) -> exact scalar affine.
        "conv_w": jax.random.uniform(ks[0], (), jnp.float32, -1.0, 1.0),
        "conv_b": jax.random.uniform(ks[1], (), jnp.float32, -1.0, 1.0),
        "conv1_w": jax.random.uniform(ks[2], (), jnp.float32, -1.0, 1.0),
        "conv1_b": jax.random.uniform(ks[3], (), jnp.float32, -1.0, 1.0),
        # BatchNorm2d(1) affine params + running stats (eval mode).
        "bn_gamma": jax.random.uniform(ks[4], (), jnp.float32, 0.5, 1.5),
        "bn_beta": jax.random.uniform(ks[5], (), jnp.float32, -0.1, 0.1),
        "bn_mean": jax.random.uniform(ks[6], (), jnp.float32, -0.1, 0.1),
        "bn_var": jax.random.uniform(ks[7], (), jnp.float32, 0.8, 1.2),
        # LayerNorm([1, 224, 224]) elementwise affine.
        "ln_weight": 1.0 + 0.1 * jax.random.normal(ks[8], (C, H, W), jnp.float32),
        "ln_bias": 0.1 * jax.random.normal(ks[9], (C, H, W), jnp.float32),
    }
    x = jax.random.normal(ks[10], (B, C, H, W), jnp.float32)

    prepped = prepare_params(raw)
    fwd = jax.jit(submodel_forward)
    out = fwd(x, prepped)
    jax.block_until_ready(out)

    assert out.shape == (B, C, H, W)
    ref = reference_forward(x, raw)
    assert jnp.allclose(out, ref, atol=1e-3, rtol=1e-3), \
        float(jnp.max(jnp.abs(out - ref)))
    print("KERNEL_OK")
</pallas_src>

<mosaic_0001>
module attributes {stable_mosaic.version = 11 : i64} {
  func.func @_fused_submodel_kernel(%arg0: i32, %arg1: memref<3xf32, #tpu.memory_space<smem>>, %arg2: memref<1x8x6272xf32, #tpu.memory_space<vmem>>, %arg3: memref<1x8x6272xf32, #tpu.memory_space<vmem>>, %arg4: memref<1x8x6272xf32, #tpu.memory_space<vmem>>, %arg5: memref<1x8x6272xf32, #tpu.memory_space<vmem>>) attributes {dimension_semantics = [#tpu.dimension_semantics<parallel>], iteration_bounds = array<i64: 2>, scalar_prefetch = 0 : i64, scratch_operands = 0 : i64, tpu.core_type = #tpu.core_type<tc>, window_params = [{transform_indices = @transform_0, window_bounds = array<i64: 3>}, {transform_indices = @transform_1, window_bounds = array<i64: 1, 8, 6272>}, {pipeline_mode = #tpu.pipeline_mode<synchronous>, transform_indices = @transform_2, window_bounds = array<i64: 1, 8, 6272>}, {pipeline_mode = #tpu.pipeline_mode<synchronous>, transform_indices = @transform_3, window_bounds = array<i64: 1, 8, 6272>}, {transform_indices = @transform_4, window_bounds = array<i64: 1, 8, 6272>}]} {
    %c0 = arith.constant 0 : index
    %0 = memref.load %arg1[%c0] : memref<3xf32, #tpu.memory_space<smem>>
    %c1 = arith.constant 1 : index
    %1 = memref.load %arg1[%c1] : memref<3xf32, #tpu.memory_space<smem>>
    %c2 = arith.constant 2 : index
    %2 = memref.load %arg1[%c2] : memref<3xf32, #tpu.memory_space<smem>>
    %c0_0 = arith.constant 0 : index
    %c0_1 = arith.constant 0 : index
    %c0_2 = arith.constant 0 : index
    %3 = vector.load %arg2[%c0_0, %c0_1, %c0_2] : memref<1x8x6272xf32, #tpu.memory_space<vmem>>, vector<1x8x6272xf32>
    %4 = vector.broadcast %0 : f32 to vector<1x8x6272xf32>
    %5 = arith.mulf %4, %3 : vector<1x8x6272xf32>
    %6 = vector.broadcast %1 : f32 to vector<1x8x6272xf32>
    %7 = arith.addf %5, %6 : vector<1x8x6272xf32>
    %cst = arith.constant 0.000000e+00 : f32
    %8 = vector.broadcast %cst : f32 to vector<1x8x6272xf32>
    %9 = arith.maximumf %7, %8 : vector<1x8x6272xf32>
    %cst_3 = arith.constant dense<0.000000e+00> : vector<1x8xf32>
    %10 = vector.multi_reduction <add>, %9, %cst_3 [2] : vector<1x8x6272xf32> to vector<1x8xf32>
    %11 = vector.shape_cast %10 : vector<1x8xf32> to vector<1x8x1xf32>
    %12 = arith.mulf %9, %9 : vector<1x8x6272xf32>
    %cst_4 = arith.constant dense<0.000000e+00> : vector<1x8xf32>
    %13 = vector.multi_reduction <add>, %12, %cst_4 [2] : vector<1x8x6272xf32> to vector<1x8xf32>
    %14 = vector.shape_cast %13 : vector<1x8xf32> to vector<1x8x1xf32>
    %cst_5 = arith.constant dense<0.000000e+00> : vector<1x1xf32>
    %15 = vector.multi_reduction <add>, %11, %cst_5 [1] : vector<1x8x1xf32> to vector<1x1xf32>
    %16 = vector.shape_cast %15 : vector<1x1xf32> to vector<1x1x1xf32>
    %cst_6 = arith.constant dense<0.000000e+00> : vector<1x1xf32>
    %17 = vector.multi_reduction <add>, %14, %cst_6 [1] : vector<1x8x1xf32> to vector<1x1xf32>
    %18 = vector.shape_cast %17 : vector<1x1xf32> to vector<1x1x1xf32>
    %cst_7 = arith.constant 1.99298465E-5 : f32
    %19 = vector.broadcast %cst_7 : f32 to vector<1x1x1xf32>
    %20 = arith.mulf %16, %19 : vector<1x1x1xf32>
    %cst_8 = arith.constant 1.99298465E-5 : f32
    %21 = vector.broadcast %cst_8 : f32 to vector<1x1x1xf32>
    %22 = arith.mulf %18, %21 : vector<1x1x1xf32>
    %23 = arith.mulf %20, %20 : vector<1x1x1xf32>
    %24 = arith.subf %22, %23 : vector<1x1x1xf32>
    %cst_9 = arith.constant 0.000000e+00 : f32
    %25 = vector.broadcast %cst_9 : f32 to vector<1x1x1xf32>
    %26 = arith.maximumf %24, %25 : vector<1x1x1xf32>
    %27 = arith.mulf %2, %2 : f32
    %28 = vector.broadcast %27 : f32 to vector<1x1x1xf32>
    %29 = arith.mulf %28, %26 : vector<1x1x1xf32>
    %cst_10 = arith.constant 9.99999974E-6 : f32
    %30 = vector.broadcast %cst_10 : f32 to vector<1x1x1xf32>
    %31 = arith.addf %29, %30 : vector<1x1x1xf32>
    %32 = math.rsqrt %31 : vector<1x1x1xf32>
    %33 = vector.broadcast %2 : f32 to vector<1x1x1xf32>
    %34 = arith.mulf %33, %32 : vector<1x1x1xf32>
    %35 = vector.broadcast %20 : vector<1x1x1xf32> to vector<1x8x6272xf32>
    %36 = arith.subf %9, %35 : vector<1x8x6272xf32>
    %37 = vector.broadcast %34 : vector<1x1x1xf32> to vector<1x8x6272xf32>
    %38 = arith.mulf %36, %37 : vector<1x8x6272xf32>
    %c0_11 = arith.constant 0 : index
    %c0_12 = arith.constant 0 : index
    %c0_13 = arith.constant 0 : index
    %39 = vector.load %arg3[%c0_11, %c0_12, %c0_13] : memref<1x8x6272xf32, #tpu.memory_space<vmem>>, vector<1x8x6272xf32>
    %40 = arith.mulf %38, %39 : vector<1x8x6272xf32>
    %c0_14 = arith.constant 0 : index
    %c0_15 = arith.constant 0 : index
    %c0_16 = arith.constant 0 : index
    %41 = vector.load %arg4[%c0_14, %c0_15, %c0_16] : memref<1x8x6272xf32, #tpu.memory_space<vmem>>, vector<1x8x6272xf32>
    %42 = arith.addf %40, %41 : vector<1x8x6272xf32>
    %c0_17 = arith.constant 0 : index
    %c0_18 = arith.constant 0 : index
    %c0_19 = arith.constant 0 : index
    %43 = vector.load %arg5[%c0_17, %c0_18, %c0_19] : memref<1x8x6272xf32, #tpu.memory_space<vmem>>, vector<1x8x6272xf32>
    tpu.vector_store %arg5[%c0_17, %c0_18, %c0_19], %42 {strides = array<i32>} : memref<1x8x6272xf32, #tpu.memory_space<vmem>>, vector<1x8x6272xf32>,
    return
  }
  func.func @transform_0(%arg0: i32) -> i32 {
    %c0_i32 = arith.constant 0 : i32
    %c0_i32_0 = arith.constant 0 : i32
    return %c0_i32 : i32
  }
  func.func @transform_1(%arg0: i32) -> (i32, i32, i32) {
    %c0_i32 = arith.constant 0 : i32
    %c0_i32_0 = arith.constant 0 : i32
    %c0_i32_1 = arith.constant 0 : i32
    return %arg0, %c0_i32, %c0_i32_0 : i32, i32, i32
  }
  func.func @transform_2(%arg0: i32) -> (i32, i32, i32) {
    %c0_i32 = arith.constant 0 : i32
    %c0_i32_0 = arith.constant 0 : i32
    %c0_i32_1 = arith.constant 0 : i32
    %c0_i32_2 = arith.constant 0 : i32
    return %c0_i32, %c0_i32_0, %c0_i32_1 : i32, i32, i32
  }
  func.func @transform_3(%arg0: i32) -> (i32, i32, i32) {
    %c0_i32 = arith.constant 0 : i32
    %c0_i32_0 = arith.constant 0 : i32
    %c0_i32_1 = arith.constant 0 : i32
    %c0_i32_2 = arith.constant 0 : i32
    return %c0_i32, %c0_i32_0, %c0_i32_1 : i32, i32, i32
  }
  func.func @transform_4(%arg0: i32) -> (i32, i32, i32) {
    %c0_i32 = arith.constant 0 : i32
    %c0_i32_0 = arith.constant 0 : i32
    %c0_i32_1 = arith.constant 0 : i32
    return %arg0, %c0_i32, %c0_i32_0 : i32, i32, i32
  }
}

</mosaic_0001>

<llo_original>
// kernel: submodel_forward.1
$region0: #{submodel_forward.1}
  #allocation0 [shape = 'u32[]', space=smem, size = 0x4, offset = 0x4, fixed_abs, tag = 'smem constant byte address 0x4 - core index']
  #allocation1 [shape = 'u32[144,128]{1,0:T(1,128)}', space=vmem, size = 0x12000, scoped, tag = 'internal scratch']
  %s0 = inlined_call_operand.vmem [shape: f32[3], index: 0, kind: input, shape index: {}]
  %s1 = inlined_call_operand.vmem [shape: f32[2,8,6272], index: 1, kind: input, shape index: {}]
  %s2 = inlined_call_operand.vmem [shape: f32[1,8,6272], index: 2, kind: input, shape index: {}]
  %s3 = inlined_call_operand.vmem [shape: f32[1,8,6272], index: 3, kind: input, shape index: {}]
  %s4 = inlined_call_operand.vmem [shape: f32[2,8,6272], index: 4, kind: output, shape index: {}]
  %s5 = sld [smem:[#allocation0]]
  $region53: #{submodel_forward.1} parent=0
    _
  %s7 = ssub.s32 1, %s5
  %s8 = scalar_select 0, %s7, %s5
  $region1: #{submodel_forward.1} parent=0
    #allocation2 [shape = 'u8[512]{0}', space=smem, size = 0x200, scoped, tag = 'input window, operand 0, single buffered']
    #allocation3 [shape = 's32[2]{0}', space=sflag, size = 0x8, scoped, tag = 'scoped memory for submodel_forward.1']
    %9 = vsyncpa [#allocation3], 0
    loop: start=0, step=1, limit=4
    $region2: #{submodel_forward.1} parent=1 // loop_pre_header
      _
    $region3: #{submodel_forward.1} parent=1 // loop_header
      %s11 = sphi 0, %s15
      %p12 = scmp.ge.s32.totalorder %s11, 4
      %s19 = sphi 0, %s19
      %s21 = sphi 0, %s19
      %s22 = sphi 0, %s21
      %s36 = sphi 0, %s22
      %s42 = sphi 0, %s44
      %s45 = sphi 0, %s42
      %s46 = sphi 0, %s45
      %s62 = sphi 0, %s46
      %s66 = sphi 0, %s66
      %s68 = sphi 0, %s66
      %s69 = sphi 0, %s68
      %s83 = sphi 0, %s69
      %s87 = sphi 0, %s87
      %s89 = sphi 0, %s87
      %s90 = sphi 0, %s89
      %s104 = sphi 0, %s90
      %s110 = sphi 0, %s112
      %s113 = sphi 0, %s110
      %s114 = sphi 0, %s113
      %s130 = sphi 0, %s114
    $region4: #{submodel_forward.1} parent=1 // loop_header_branch
      %14 = sbr.rel (%p12) target = $region8
    $region5: #{submodel_forward.1} parent=1 // loop_body
      %s16 = ssub.s32 %s11, 1
      %s17 = ssub.s32 %s11, 2
      %s18 = sadd.s32 %s11, 1
      %s20 = sadd.s32 %s19, 1
      %p23 = scmp.eq.s32.totalorder %s11, 1
      %p24 = scmp.ne.s32.totalorder %s19, %s21
      %p25 = scmp.eq.s32.totalorder %s11, 0
      %p26 = por %p24, %p25
      %p27 = scmp.ne.s32.totalorder %s19, %s21
      %p28 = scmp.eq.s32.totalorder %s16, 1
      %p29 = por %p27, %p28
      %p30 = scmp.ne.s32.totalorder %s21, %s22
      %p31 = scmp.eq.s32.totalorder %s16, 0
      %p32 = por %p30, %p31
      %p33 = scmp.ne.s32.totalorder %s21, %s22
      %p34 = scmp.eq.s32.totalorder %s17, 1
      %p35 = por %p33, %p34
      %p37 = scmp.ne.s32.totalorder %s22, %s36
      %p38 = scmp.eq.s32.totalorder %s17, 0
      %p39 = por %p37, %p38
      %s40 = ssub.s32 %s11, %s18
      %p41 = scmp.eq.s32.totalorder %s40, 0
      %s43 = sadd.s32 %s42, 1
      %s44 = scalar_select %p41, %s42, %s43
      %p47 = pneg %p41
      %p48 = scmp.eq.s32.totalorder %s11, 1
      %p49 = por %p47, %p48
      %p50 = scmp.ne.s32.totalorder %s42, %s45
      %p51 = scmp.eq.s32.totalorder %s11, 0
      %p52 = por %p50, %p51
      %p53 = scmp.ne.s32.totalorder %s42, %s45
      %p54 = scmp.eq.s32.totalorder %s16, 1
      %p55 = por %p53, %p54
      %p56 = scmp.ne.s32.totalorder %s45, %s46
      %p57 = scmp.eq.s32.totalorder %s16, 0
      %p58 = por %p56, %p57
      %p59 = scmp.ne.s32.totalorder %s45, %s46
      %p60 = scmp.eq.s32.totalorder %s17, 1
      %p61 = por %p59, %p60
      %p63 = scmp.ne.s32.totalorder %s46, %s62
      %p64 = scmp.eq.s32.totalorder %s17, 0
      %p65 = por %p63, %p64
      %s67 = sadd.s32 %s66, 1
      %p70 = scmp.eq.s32.totalorder %s11, 1
      %p71 = scmp.ne.s32.totalorder %s66, %s68
      %p72 = scmp.eq.s32.totalorder %s11, 0
      %p73 = por %p71, %p72
      %p74 = scmp.ne.s32.totalorder %s66, %s68
      %p75 = scmp.eq.s32.totalorder %s16, 1
      %p76 = por %p74, %p75
      %p77 = scmp.ne.s32.totalorder %s68, %s69
      %p78 = scmp.eq.s32.totalorder %s16, 0
      %p79 = por %p77, %p78
      %p80 = scmp.ne.s32.totalorder %s68, %s69
      %p81 = scmp.eq.s32.totalorder %s17, 1
      %p82 = por %p80, %p81
      %p84 = scmp.ne.s32.totalorder %s69, %s83
      %p85 = scmp.eq.s32.totalorder %s17, 0
      %p86 = por %p84, %p85
      %s88 = sadd.s32 %s87, 1
      %p91 = scmp.eq.s32.totalorder %s11, 1
      %p92 = scmp.ne.s32.totalorder %s87, %s89
      %p93 = scmp.eq.s32.totalorder %s11, 0
      %p94 = por %p92, %p93
      %p95 = scmp.ne.s32.totalorder %s87, %s89
      %p96 = scmp.eq.s32.totalorder %s16, 1
      %p97 = por %p95, %p96
      %p98 = scmp.ne.s32.totalorder %s89, %s90
      %p99 = scmp.eq.s32.totalorder %s16, 0
      %p100 = por %p98, %p99
      %p101 = scmp.ne.s32.totalorder %s89, %s90
      %p102 = scmp.eq.s32.totalorder %s17, 1
      %p103 = por %p101, %p102
      %p105 = scmp.ne.s32.totalorder %s90, %s104
      %p106 = scmp.eq.s32.totalorder %s17, 0
      %p107 = por %p105, %p106
      %s108 = ssub.s32 %s11, %s18
      %p109 = scmp.eq.s32.totalorder %s108, 0
      %s111 = sadd.s32 %s110, 1
      %s112 = scalar_select %p109, %s110, %s111
      %p115 = pneg %p109
      %p116 = scmp.eq.s32.totalorder %s11, 1
      %p117 = por %p115, %p116
      %p118 = scmp.ne.s32.totalorder %s110, %s113
      %p119 = scmp.eq.s32.totalorder %s11, 0
      %p120 = por %p118, %p119
      %p121 = scmp.ne.s32.totalorder %s110, %s113
      %p122 = scmp.eq.s32.totalorder %s16, 1
      %p123 = por %p121, %p122
      %p124 = scmp.ne.s32.totalorder %s113, %s114
      %p125 = scmp.eq.s32.totalorder %s16, 0
      %p126 = por %p124, %p125
      %p127 = scmp.ne.s32.totalorder %s113, %s114
      %p128 = scmp.eq.s32.totalorder %s17, 1
      %p129 = por %p127, %p128
      %p131 = scmp.ne.s32.totalorder %s114, %s130
      %p132 = scmp.eq.s32.totalorder %s17, 0
      %p133 = por %p131, %p132
      %p134 = scmp.le.s32.totalorder 1, %s11
      %p135 = scmp.lt.s32.totalorder %s11, 3
      %p136 = pnand %p134, %p135
      %p137 = pneg %p136
      // Predicated region
      $region9: #{submodel_forward.1} parent=5 // pred_check
        _
      $region10: #{submodel_forward.1} parent=5 // pred_check_branch
        %139 = sbr.rel (%p136) target = $region12
      $region11: #{submodel_forward.1} parent=5 // pred_region
        %s140 = ssub.s32 %s11, 1
        // Predicated region
        $region13: #{submodel_forward.1} parent=11 // pred_check
          %p141 = pneg %p32
        $region14: #{submodel_forward.1} parent=11 // pred_check_branch
          %143 = sbr.rel (%p141) target = $region16
        $region15: #{submodel_forward.1} parent=11 // pred_region
          %s145 = ssub.s32 16, 16
          %146 = vsyncadd [#allocation3], %s145
          %s148 = sshll.u32 %s0, 4
          %s149 = int_to_ptr.vmem [resolvable:$true] %s148
          %151 = dma.vmem_to_smem %s149, 16, [#allocation2], [#allocation3]
        $region16: #{submodel_forward.1} parent=11 // pred_fallthru
          _
        // Predicated region
        $region17: #{submodel_forward.1} parent=11 // pred_check
          %p152 = pneg %p79
        $region18: #{submodel_forward.1} parent=11 // pred_check_branch
          %154 = sbr.rel (%p152) target = $region20
        $region19: #{submodel_forward.1} parent=11 // pred_region
          _
        $region20: #{submodel_forward.1} parent=11 // pred_fallthru
          _
        // Predicated region
        $region21: #{submodel_forward.1} parent=11 // pred_check
          %p155 = pneg %p100
        $region22: #{submodel_forward.1} parent=11 // pred_check_branch
          %157 = sbr.rel (%p155) target = $region24
        $region23: #{submodel_forward.1} parent=11 // pred_region
          _
        $region24: #{submodel_forward.1} parent=11 // pred_fallthru
          _
      $region12: #{submodel_forward.1} parent=5 // pred_fallthru
        _
      %p158 = scmp.lt.s32.totalorder %s11, 2
      // Predicated region
      $region25: #{submodel_forward.1} parent=5 // pred_check
        %p159 = pneg %p158
      $region26: #{submodel_forward.1} parent=5 // pred_check_branch
        %161 = sbr.rel (%p159) target = $region28
      $region27: #{submodel_forward.1} parent=5 // pred_region
        // Predicated region
        $region29: #{submodel_forward.1} parent=27 // pred_check
          %p162 = pneg %p52
        $region30: #{submodel_forward.1} parent=27 // pred_check_branch
          %164 = sbr.rel (%p162) target = $region32
        $region31: #{submodel_forward.1} parent=27 // pred_region
          %p165 = scmp.lt.s32.totalorder %s11, 1
          %s166 = scalar_select %p165, %s11, 1
          %s167 = smul.addr %s166, 49
          %s168 = smul.addr %s167, 8
          %s169 = scalar_lea.vmem %s1, %s168
        $region32: #{submodel_forward.1} parent=27 // pred_fallthru
          _
      $region28: #{submodel_forward.1} parent=5 // pred_fallthru
        _
      %p170 = scmp.le.s32.totalorder 1, %s11
      %p171 = scmp.lt.s32.totalorder %s11, 3
      %p172 = pnand %p170, %p171
      %p173 = pneg %p172
      // Predicated region
      $region33: #{submodel_forward.1} parent=5 // pred_check
        _
      $region34: #{submodel_forward.1} parent=5 // pred_check_branch
        %175 = sbr.rel (%p172) target = $region36
      $region35: #{submodel_forward.1} parent=5 // pred_region
        %s176 = ssub.s32 %s11, 1
        // Predicated region
        $region37: #{submodel_forward.1} parent=35 // pred_check
          %p177 = pneg %p32
        $region38: #{submodel_forward.1} parent=35 // pred_check_branch
          %179 = sbr.rel (%p177) target = $region40
        $region39: #{submodel_forward.1} parent=35 // pred_region
          %180 = dma.done [#allocation3], 16
        $region40: #{submodel_forward.1} parent=35 // pred_fallthru
          _
        %181 = sfence
        %p182 = pneg %p32
        %p183 = pneg %p29
        %p184 = scmp.lt.s32.totalorder %s16, 1
        %s185 = scalar_select %p184, %s16, 1
        %s186 = smul.addr %s185, 49
        %s187 = smul.addr %s186, 8
        %s188 = scalar_lea.vmem %s1, %s187
        %p189 = pneg %p58
        %p190 = pneg %p55
        %p191 = pneg %p79
        %p192 = pneg %p76
        %p193 = pneg %p100
        %p194 = pneg %p97
        %p195 = pneg %p126
        %p196 = pneg %p123
        %p197 = scmp.lt.s32.totalorder %s16, 1
        %s198 = scalar_select %p197, %s16, 1
        %s199 = smul.addr %s198, 49
        %s200 = smul.addr %s199, 8
        %s201 = scalar_lea.vmem %s4, %s200
        %p202 = scmp.lt.s32.totalorder %s16, 1
        %s203 = scalar_select %p202, %s16, 1
        %s204 = smul.addr %s203, 49
        %s205 = smul.addr %s204, 8
        %s206 = scalar_lea.vmem %s1, %s205
        %p207 = scmp.lt.s32.totalorder %s16, 1
        %s208 = scalar_select %p207, %s16, 1
        %s209 = smul.addr %s208, 49
        %s210 = smul.addr %s209, 8
        %s211 = scalar_lea.vmem %s4, %s210
        %s212 = sld [smem:[#allocation2]]
        %s213 = sld [smem:[#allocation2 + $0x1]]
        %s214 = sld [smem:[#allocation2 + $0x2]]
        %v215 = vld [vmem:[%s206] sm:$0xff]
        %v216 = vld [vmem:[%s206 + $0x8] sm:$0xff]
        %v217 = vld [vmem:[%s206 + $0x10] sm:$0xff]
        %v218 = vld [vmem:[%s206 + $0x18] sm:$0xff]
        %v219 = vld [vmem:[%s206 + $0x20] sm:$0xff]
        %v220 = vld [vmem:[%s206 + $0x28] sm:$0xff]
        %v221 = vld [vmem:[%s206 + $0x30] sm:$0xff]
        %v222 = vld [vmem:[%s206 + $0x38] sm:$0xff]
        %v223 = vld [vmem:[%s206 + $0x40] sm:$0xff]
        %v224 = vld [vmem:[%s206 + $0x48] sm:$0xff]
        %v225 = vld [vmem:[%s206 + $0x50] sm:$0xff]
        %v226 = vld [vmem:[%s206 + $0x58] sm:$0xff]
        %v227 = vld [vmem:[%s206 + $0x60] sm:$0xff]
        %v228 = vld [vmem:[%s206 + $0x68] sm:$0xff]
        %v229 = vld [vmem:[%s206 + $0x70] sm:$0xff]
        %v230 = vld [vmem:[%s206 + $0x78] sm:$0xff]
        %v231 = vld [vmem:[%s206 + $0x80] sm:$0xff]
        %v232 = vld [vmem:[%s206 + $0x88] sm:$0xff]
        %v233 = vld [vmem:[%s206 + $0x90] sm:$0xff]
        %v234 = vld [vmem:[%s206 + $0x98] sm:$0xff]
        %v235 = vld [vmem:[%s206 + $0xa0] sm:$0xff]
        %v236 = vld [vmem:[%s206 + $0xa8] sm:$0xff]
        %v237 = vld [vmem:[%s206 + $0xb0] sm:$0xff]
        %v238 = vld [vmem:[%s206 + $0xb8] sm:$0xff]
        %v239 = vld [vmem:[%s206 + $0xc0] sm:$0xff]
        %v240 = vld [vmem:[%s206 + $0xc8] sm:$0xff]
        %v241 = vld [vmem:[%s206 + $0xd0] sm:$0xff]
        %v242 = vld [vmem:[%s206 + $0xd8] sm:$0xff]
        %v243 = vld [vmem:[%s206 + $0xe0] sm:$0xff]
        %v244 = vld [vmem:[%s206 + $0xe8] sm:$0xff]
        %v245 = vld [vmem:[%s206 + $0xf0] sm:$0xff]
        %v246 = vld [vmem:[%s206 + $0xf8] sm:$0xff]
        %v247 = vld [vmem:[%s206 + $0x100] sm:$0xff]
        %v248 = vld [vmem:[%s206 + $0x108] sm:$0xff]
        %v249 = vld [vmem:[%s206 + $0x110] sm:$0xff]
        %v250 = vld [vmem:[%s206 + $0x118] sm:$0xff]
        %v251 = vld [vmem:[%s206 + $0x120] sm:$0xff]
        %v252 = vld [vmem:[%s206 + $0x128] sm:$0xff]
        %v253 = vld [vmem:[%s206 + $0x130] sm:$0xff]
        %v254 = vld [vmem:[%s206 + $0x138] sm:$0xff]
        %v255 = vld [vmem:[%s206 + $0x140] sm:$0xff]
        %v256 = vld [vmem:[%s206 + $0x148] sm:$0xff]
        %v257 = vld [vmem:[%s206 + $0x150] sm:$0xff]
        %v258 = vld [vmem:[%s206 + $0x158] sm:$0xff]
        %v259 = vld [vmem:[%s206 + $0x160] sm:$0xff]
        %v260 = vld [vmem:[%s206 + $0x168] sm:$0xff]
        %v261 = vld [vmem:[%s206 + $0x170] sm:$0xff]
        %v262 = vld [vmem:[%s206 + $0x178] sm:$0xff]
        %v263 = vld [vmem:[%s206 + $0x180] sm:$0xff]
        %v264 = vstv %s212
        %v265 = vmul.f32 %v264, %v215
        %v266 = vmul.f32 %v264, %v216
        %v267 = vmul.f32 %v264, %v217
        %v268 = vmul.f32 %v264, %v218
        %v269 = vmul.f32 %v264, %v219
        %v270 = vmul.f32 %v264, %v220
        %v271 = vmul.f32 %v264, %v221
        %v272 = vmul.f32 %v264, %v222
        %v273 = vmul.f32 %v264, %v223
        %v274 = vmul.f32 %v264, %v224
        %v275 = vmul.f32 %v264, %v225
        %v276 = vmul.f32 %v264, %v226
        %v277 = vmul.f32 %v264, %v227
        %v278 = vmul.f32 %v264, %v228
        %v279 = vmul.f32 %v264, %v229
        %v280 = vmul.f32 %v264, %v230
        %v281 = vmul.f32 %v264, %v231
        %v282 = vmul.f32 %v264, %v232
        %v283 = vmul.f32 %v264, %v233
        %v284 = vmul.f32 %v264, %v234
        %v285 = vmul.f32 %v264, %v235
        %v286 = vmul.f32 %v264, %v236
        %v287 = vmul.f32 %v264, %v237
        %v288 = vmul.f32 %v264, %v238
        %v289 = vmul.f32 %v264, %v239
        %v290 = vmul.f32 %v264, %v240
        %v291 = vmul.f32 %v264, %v241
        %v292 = vmul.f32 %v264, %v242
        %v293 = vmul.f32 %v264, %v243
        %v294 = vmul.f32 %v264, %v244
        %v295 = vmul.f32 %v264, %v245
        %v296 = vmul.f32 %v264, %v246
        %v297 = vmul.f32 %v264, %v247
        %v298 = vmul.f32 %v264, %v248
        %v299 = vmul.f32 %v264, %v249
        %v300 = vmul.f32 %v264, %v250
        %v301 = vmul.f32 %v264, %v251
        %v302 = vmul.f32 %v264, %v252
        %v303 = vmul.f32 %v264, %v253
        %v304 = vmul.f32 %v264, %v254
        %v305 = vmul.f32 %v264, %v255
        %v306 = vmul.f32 %v264, %v256
        %v307 = vmul.f32 %v264, %v257
        %v308 = vmul.f32 %v264, %v258
        %v309 = vmul.f32 %v264, %v259
        %v310 = vmul.f32 %v264, %v260
        %v311 = vmul.f32 %v264, %v261
        %v312 = vmul.f32 %v264, %v262
        %v313 = vmul.f32 %v264, %v263
        %v314 = vstv %s213
        %v315 = vadd.f32 %v265, %v314
        %v316 = vadd.f32 %v266, %v314
        %v317 = vadd.f32 %v267, %v314
        %v318 = vadd.f32 %v268, %v314
        %v319 = vadd.f32 %v269, %v314
        %v320 = vadd.f32 %v270, %v314
        %v321 = vadd.f32 %v271, %v314
        %v322 = vadd.f32 %v272, %v314
        %v323 = vadd.f32 %v273, %v314
        %v324 = vadd.f32 %v274, %v314
        %v325 = vadd.f32 %v275, %v314
        %v326 = vadd.f32 %v276, %v314
        %v327 = vadd.f32 %v277, %v314
        %v328 = vadd.f32 %v278, %v314
        %v329 = vadd.f32 %v279, %v314
        %v330 = vadd.f32 %v280, %v314
        %v331 = vadd.f32 %v281, %v314
        %v332 = vadd.f32 %v282, %v314
        %v333 = vadd.f32 %v283, %v314
        %v334 = vadd.f32 %v284, %v314
        %v335 = vadd.f32 %v285, %v314
        %v336 = vadd.f32 %v286, %v314
        %v337 = vadd.f32 %v287, %v314
        %v338 = vadd.f32 %v288, %v314
        %v339 = vadd.f32 %v289, %v314
        %v340 = vadd.f32 %v290, %v314
        %v341 = vadd.f32 %v291, %v314
        %v342 = vadd.f32 %v292, %v314
        %v343 = vadd.f32 %v293, %v314
        %v344 = vadd.f32 %v294, %v314
        %v345 = vadd.f32 %v295, %v314
        %v346 = vadd.f32 %v296, %v314
        %v347 = vadd.f32 %v297, %v314
        %v348 = vadd.f32 %v298, %v314
        %v349 = vadd.f32 %v299, %v314
        %v350 = vadd.f32 %v300, %v314
        %v351 = vadd.f32 %v301, %v314
        %v352 = vadd.f32 %v302, %v314
        %v353 = vadd.f32 %v303, %v314
        %v354 = vadd.f32 %v304, %v314
        %v355 = vadd.f32 %v305, %v314
        %v356 = vadd.f32 %v306, %v314
        %v357 = vadd.f32 %v307, %v314
        %v358 = vadd.f32 %v308, %v314
        %v359 = vadd.f32 %v309, %v314
        %v360 = vadd.f32 %v310, %v314
        %v361 = vadd.f32 %v311, %v314
        %v362 = vadd.f32 %v312, %v314
        %v363 = vadd.f32 %v313, %v314
        %v364 = vmax.f32 %v315, 0.0
        %v365 = vmax.f32 %v316, 0.0
        %v366 = vmax.f32 %v317, 0.0
        %v367 = vmax.f32 %v318, 0.0
        %v368 = vmax.f32 %v319, 0.0
        %v369 = vmax.f32 %v320, 0.0
        %v370 = vmax.f32 %v321, 0.0
        %v371 = vmax.f32 %v322, 0.0
        %v372 = vmax.f32 %v323, 0.0
        %v373 = vmax.f32 %v324, 0.0
        %v374 = vmax.f32 %v325, 0.0
        %v375 = vmax.f32 %v326, 0.0
        %v376 = vmax.f32 %v327, 0.0
        %v377 = vmax.f32 %v328, 0.0
        %v378 = vmax.f32 %v329, 0.0
        %v379 = vmax.f32 %v330, 0.0
        %v380 = vmax.f32 %v331, 0.0
        %v381 = vmax.f32 %v332, 0.0
        %v382 = vmax.f32 %v333, 0.0
        %v383 = vmax.f32 %v334, 0.0
        %v384 = vmax.f32 %v335, 0.0
        %v385 = vmax.f32 %v336, 0.0
        %v386 = vmax.f32 %v337, 0.0
        %v387 = vmax.f32 %v338, 0.0
        %v388 = vmax.f32 %v339, 0.0
        %v389 = vmax.f32 %v340, 0.0
        %v390 = vmax.f32 %v341, 0.0
        %v391 = vmax.f32 %v342, 0.0
        %v392 = vmax.f32 %v343, 0.0
        %v393 = vmax.f32 %v344, 0.0
        %v394 = vmax.f32 %v345, 0.0
        %v395 = vmax.f32 %v346, 0.0
        %v396 = vmax.f32 %v347, 0.0
        %v397 = vmax.f32 %v348, 0.0
        %v398 = vmax.f32 %v349, 0.0
        %v399 = vmax.f32 %v350, 0.0
        %v400 = vmax.f32 %v351, 0.0
        %v401 = vmax.f32 %v352, 0.0
        %v402 = vmax.f32 %v353, 0.0
        %v403 = vmax.f32 %v354, 0.0
        %v404 = vmax.f32 %v355, 0.0
        %v405 = vmax.f32 %v356, 0.0
        %v406 = vmax.f32 %v357, 0.0
        %v407 = vmax.f32 %v358, 0.0
        %v408 = vmax.f32 %v359, 0.0
        %v409 = vmax.f32 %v360, 0.0
        %v410 = vmax.f32 %v361, 0.0
        %v411 = vmax.f32 %v362, 0.0
        %v412 = vmax.f32 %v363, 0.0
        %v413 = vadd.f32 %v364, %v365
        %v414 = vadd.f32 %v413, %v366
        %v415 = vadd.f32 %v414, %v367
        %v416 = vadd.f32 %v415, %v368
        %v417 = vadd.f32 %v416, %v369
        %v418 = vadd.f32 %v417, %v370
        %v419 = vadd.f32 %v418, %v371
        %v420 = vadd.f32 %v419, %v372
        %v421 = vadd.f32 %v420, %v373
        %v422 = vadd.f32 %v421, %v374
        %v423 = vadd.f32 %v422, %v375
        %v424 = vadd.f32 %v423, %v376
        %v425 = vadd.f32 %v424, %v377
        %v426 = vadd.f32 %v425, %v378
        %v427 = vadd.f32 %v426, %v379
        %v428 = vadd.f32 %v427, %v380
        %v429 = vadd.f32 %v428, %v381
        %v430 = vadd.f32 %v429, %v382
        %v431 = vadd.f32 %v430, %v383
        %v432 = vadd.f32 %v431, %v384
        %v433 = vadd.f32 %v432, %v385
        %v434 = vadd.f32 %v433, %v386
        %v435 = vadd.f32 %v434, %v387
        %v436 = vadd.f32 %v435, %v388
        %v437 = vadd.f32 %v436, %v389
        %v438 = vadd.f32 %v437, %v390
        %v439 = vadd.f32 %v438, %v391
        %v440 = vadd.f32 %v439, %v392
        %v441 = vadd.f32 %v440, %v393
        %v442 = vadd.f32 %v441, %v394
        %v443 = vadd.f32 %v442, %v395
        %v444 = vadd.f32 %v443, %v396
        %v445 = vadd.f32 %v444, %v397
        %v446 = vadd.f32 %v445, %v398
        %v447 = vadd.f32 %v446, %v399
        %v448 = vadd.f32 %v447, %v400
        %v449 = vadd.f32 %v448, %v401
        %v450 = vadd.f32 %v449, %v402
        %v451 = vadd.f32 %v450, %v403
        %v452 = vadd.f32 %v451, %v404
        %v453 = vadd.f32 %v452, %v405
        %v454 = vadd.f32 %v453, %v406
        %v455 = vadd.f32 %v454, %v407
        %v456 = vadd.f32 %v455, %v408
        %v457 = vadd.f32 %v456, %v409
        %v458 = vadd.f32 %v457, %v410
        %v459 = vadd.f32 %v458, %v411
        %v460 = vadd.f32 %v459, %v412
        %461 = vadd.xlane.f32.xlu0 %v460
        %v462 = vpop.xlane.xlu0 %461
        %v463 = vmul.f32 %v364, %v364
        %v464 = vmul.f32 %v365, %v365
        %v465 = vmul.f32 %v366, %v366
        %v466 = vmul.f32 %v367, %v367
        %v467 = vmul.f32 %v368, %v368
        %v468 = vmul.f32 %v369, %v369
        %v469 = vmul.f32 %v370, %v370
        %v470 = vmul.f32 %v371, %v371
        %v471 = vmul.f32 %v372, %v372
        %v472 = vmul.f32 %v373, %v373
        %v473 = vmul.f32 %v374, %v374
        %v474 = vmul.f32 %v375, %v375
        %v475 = vmul.f32 %v376, %v376
        %v476 = vmul.f32 %v377, %v377
        %v477 = vmul.f32 %v378, %v378
        %v478 = vmul.f32 %v379, %v379
        %v479 = vmul.f32 %v380, %v380
        %v480 = vmul.f32 %v381, %v381
        %v481 = vmul.f32 %v382, %v382
        %v482 = vmul.f32 %v383, %v383
        %v483 = vmul.f32 %v384, %v384
        %v484 = vmul.f32 %v385, %v385
        %v485 = vmul.f32 %v386, %v386
        %v486 = vmul.f32 %v387, %v387
        %v487 = vmul.f32 %v388, %v388
        %v488 = vmul.f32 %v389, %v389
        %v489 = vmul.f32 %v390, %v390
        %v490 = vmul.f32 %v391, %v391
        %v491 = vmul.f32 %v392, %v392
        %v492 = vmul.f32 %v393, %v393
        %v493 = vmul.f32 %v394, %v394
        %v494 = vmul.f32 %v395, %v395
        %v495 = vmul.f32 %v396, %v396
        %v496 = vmul.f32 %v397, %v397
        %v497 = vmul.f32 %v398, %v398
        %v498 = vmul.f32 %v399, %v399
        %v499 = vmul.f32 %v400, %v400
        %v500 = vmul.f32 %v401, %v401
        %v501 = vmul.f32 %v402, %v402
        %v502 = vmul.f32 %v403, %v403
        %v503 = vmul.f32 %v404, %v404
        %v504 = vmul.f32 %v405, %v405
        %v505 = vmul.f32 %v406, %v406
        %v506 = vmul.f32 %v407, %v407
        %v507 = vmul.f32 %v408, %v408
        %v508 = vmul.f32 %v409, %v409
        %v509 = vmul.f32 %v410, %v410
        %v510 = vmul.f32 %v411, %v411
        %v511 = vmul.f32 %v412, %v412
        %v512 = vadd.f32 %v463, %v464
        %v513 = vadd.f32 %v512, %v465
        %v514 = vadd.f32 %v513, %v466
        %v515 = vadd.f32 %v514, %v467
        %v516 = vadd.f32 %v515, %v468
        %v517 = vadd.f32 %v516, %v469
        %v518 = vadd.f32 %v517, %v470
        %v519 = vadd.f32 %v518, %v471
        %v520 = vadd.f32 %v519, %v472
        %v521 = vadd.f32 %v520, %v473
        %v522 = vadd.f32 %v521, %v474
        %v523 = vadd.f32 %v522, %v475
        %v524 = vadd.f32 %v523, %v476
        %v525 = vadd.f32 %v524, %v477
        %v526 = vadd.f32 %v525, %v478
        %v527 = vadd.f32 %v526, %v479
        %v528 = vadd.f32 %v527, %v480
        %v529 = vadd.f32 %v528, %v481
        %v530 = vadd.f32 %v529, %v482
        %v531 = vadd.f32 %v530, %v483
        %v532 = vadd.f32 %v531, %v484
        %v533 = vadd.f32 %v532, %v485
        %v534 = vadd.f32 %v533, %v486
        %v535 = vadd.f32 %v534, %v487
        %v536 = vadd.f32 %v535, %v488
        %v537 = vadd.f32 %v536, %v489
        %v538 = vadd.f32 %v537, %v490
        %v539 = vadd.f32 %v538, %v491
        %v540 = vadd.f32 %v539, %v492
        %v541 = vadd.f32 %v540, %v493
        %v542 = vadd.f32 %v541, %v494
        %v543 = vadd.f32 %v542, %v495
        %v544 = vadd.f32 %v543, %v496
        %v545 = vadd.f32 %v544, %v497
        %v546 = vadd.f32 %v545, %v498
        %v547 = vadd.f32 %v546, %v499
        %v548 = vadd.f32 %v547, %v500
        %v549 = vadd.f32 %v548, %v501
        %v550 = vadd.f32 %v549, %v502
        %v551 = vadd.f32 %v550, %v503
        %v552 = vadd.f32 %v551, %v504
        %v553 = vadd.f32 %v552, %v505
        %v554 = vadd.f32 %v553, %v506
        %v555 = vadd.f32 %v554, %v507
        %v556 = vadd.f32 %v555, %v508
        %v557 = vadd.f32 %v556, %v509
        %v558 = vadd.f32 %v557, %v510
        %v559 = vadd.f32 %v558, %v511
        %560 = vadd.xlane.f32.xlu0 %v559
        %v561 = vpop.xlane.xlu0 %560
        %v562 = vrot.slane %v462, 4
        %v563 = vadd.f32 %v462, %v562
        %v564 = vrot.slane %v563, 2
        %v565 = vadd.f32 %v563, %v564
        %v566 = vrot.slane %v565, 1
        %v567 = vadd.f32 %v565, %v566
        %v568 = vrot.slane %v561, 4
        %v569 = vadd.f32 %v561, %v568
        %v570 = vrot.slane %v569, 2
        %v571 = vadd.f32 %v569, %v570
        %v572 = vrot.slane %v571, 1
        %v573 = vadd.f32 %v571, %v572
        %v574 = vmul.f32 %v567, 1.9929847e-05
        %v575 = vmul.f32 %v573, 1.9929847e-05
        %v576 = vmul.f32 %v574, %v574
        %v577 = vsub.f32 %v575, %v576
        %v578 = vmax.f32 %v577, 0.0
        %s579 = smul.f32 %s214, %s214
        %v580 = vstv %s579
        %v581 = vmul.f32 %v580, %v578
        %v582 = vadd.f32 %v581, 1e-05
        %v583 = vrsqrt.pop %v582
        %v584 = vstv %s214
        %v585 = vmul.f32 %v584, %v583
        %v586 = vsub.f32 %v364, %v574
        %v587 = vsub.f32 %v365, %v574
        %v588 = vsub.f32 %v366, %v574
        %v589 = vsub.f32 %v367, %v574
        %v590 = vsub.f32 %v368, %v574
        %v591 = vsub.f32 %v369, %v574
        %v592 = vsub.f32 %v370, %v574
        %v593 = vsub.f32 %v371, %v574
        %v594 = vsub.f32 %v372, %v574
        %v595 = vsub.f32 %v373, %v574
        %v596 = vsub.f32 %v374, %v574
        %v597 = vsub.f32 %v375, %v574
        %v598 = vsub.f32 %v376, %v574
        %v599 = vsub.f32 %v377, %v574
        %v600 = vsub.f32 %v378, %v574
        %v601 = vsub.f32 %v379, %v574
        %v602 = vsub.f32 %v380, %v574
        %v603 = vsub.f32 %v381, %v574
        %v604 = vsub.f32 %v382, %v574
        %v605 = vsub.f32 %v383, %v574
        %v606 = vsub.f32 %v384, %v574
        %v607 = vsub.f32 %v385, %v574
        %v608 = vsub.f32 %v386, %v574
        %v609 = vsub.f32 %v387, %v574
        %v610 = vsub.f32 %v388, %v574
        %v611 = vsub.f32 %v389, %v574
        %v612 = vsub.f32 %v390, %v574
        %v613 = vsub.f32 %v391, %v574
        %v614 = vsub.f32 %v392, %v574
        %v615 = vsub.f32 %v393, %v574
        %v616 = vsub.f32 %v394, %v574
        %v617 = vsub.f32 %v395, %v574
        %v618 = vsub.f32 %v396, %v574
        %v619 = vsub.f32 %v397, %v574
        %v620 = vsub.f32 %v398, %v574
        %v621 = vsub.f32 %v399, %v574
        %v622 = vsub.f32 %v400, %v574
        %v623 = vsub.f32 %v401, %v574
        %v624 = vsub.f32 %v402, %v574
        %v625 = vsub.f32 %v403, %v574
        %v626 = vsub.f32 %v404, %v574
        %v627 = vsub.f32 %v405, %v574
        %v628 = vsub.f32 %v406, %v574
        %v629 = vsub.f32 %v407, %v574
        %v630 = vsub.f32 %v408, %v574
        %v631 = vsub.f32 %v409, %v574
        %v632 = vsub.f32 %v410, %v574
        %v633 = vsub.f32 %v411, %v574
        %v634 = vsub.f32 %v412, %v574
        %v635 = vmul.f32 %v586, %v585
        %v636 = vmul.f32 %v587, %v585
        %v637 = vmul.f32 %v588, %v585
        %v638 = vmul.f32 %v589, %v585
        %v639 = vmul.f32 %v590, %v585
        %v640 = vmul.f32 %v591, %v585
        %v641 = vmul.f32 %v592, %v585
        %v642 = vmul.f32 %v593, %v585
        %v643 = vmul.f32 %v594, %v585
        %v644 = vmul.f32 %v595, %v585
        %v645 = vmul.f32 %v596, %v585
        %v646 = vmul.f32 %v597, %v585
        %v647 = vmul.f32 %v598, %v585
        %v648 = vmul.f32 %v599, %v585
        %v649 = vmul.f32 %v600, %v585
        %v650 = vmul.f32 %v601, %v585
        %v651 = vmul.f32 %v602, %v585
        %v652 = vmul.f32 %v603, %v585
        %v653 = vmul.f32 %v604, %v585
        %v654 = vmul.f32 %v605, %v585
        %v655 = vmul.f32 %v606, %v585
        %v656 = vmul.f32 %v607, %v585
        %v657 = vmul.f32 %v608, %v585
        %v658 = vmul.f32 %v609, %v585
        %v659 = vmul.f32 %v610, %v585
        %v660 = vmul.f32 %v611, %v585
        %v661 = vmul.f32 %v612, %v585
        %v662 = vmul.f32 %v613, %v585
        %v663 = vmul.f32 %v614, %v585
        %v664 = vmul.f32 %v615, %v585
        %v665 = vmul.f32 %v616, %v585
        %v666 = vmul.f32 %v617, %v585
        %v667 = vmul.f32 %v618, %v585
        %v668 = vmul.f32 %v619, %v585
        %v669 = vmul.f32 %v620, %v585
        %v670 = vmul.f32 %v621, %v585
        %v671 = vmul.f32 %v622, %v585
        %v672 = vmul.f32 %v623, %v585
        %v673 = vmul.f32 %v624, %v585
        %v674 = vmul.f32 %v625, %v585
        %v675 = vmul.f32 %v626, %v585
        %v676 = vmul.f32 %v627, %v585
        %v677 = vmul.f32 %v628, %v585
        %v678 = vmul.f32 %v629, %v585
        %v679 = vmul.f32 %v630, %v585
        %v680 = vmul.f32 %v631, %v585
        %v681 = vmul.f32 %v632, %v585
        %v682 = vmul.f32 %v633, %v585
        %v683 = vmul.f32 %v634, %v585
        %v684 = vld [vmem:[%s2] sm:$0xff]
        %v685 = vld [vmem:[%s2 + $0x8] sm:$0xff]
        %v686 = vld [vmem:[%s2 + $0x10] sm:$0xff]
        %v687 = vld [vmem:[%s2 + $0x18] sm:$0xff]
        %v688 = vld [vmem:[%s2 + $0x20] sm:$0xff]
        %v689 = vld [vmem:[%s2 + $0x28] sm:$0xff]
        %v690 = vld [vmem:[%s2 + $0x30] sm:$0xff]
        %v691 = vld [vmem:[%s2 + $0x38] sm:$0xff]
        %v692 = vld [vmem:[%s2 + $0x40] sm:$0xff]
        %v693 = vld [vmem:[%s2 + $0x48] sm:$0xff]
        %v694 = vld [vmem:[%s2 + $0x50] sm:$0xff]
        %v695 = vld [vmem:[%s2 + $0x58] sm:$0xff]
        %v696 = vld [vmem:[%s2 + $0x60] sm:$0xff]
        %v697 = vld [vmem:[%s2 + $0x68] sm:$0xff]
        %v698 = vld [vmem:[%s2 + $0x70] sm:$0xff]
        %v699 = vld [vmem:[%s2 + $0x78] sm:$0xff]
        %v700 = vld [vmem:[%s2 + $0x80] sm:$0xff]
        %v701 = vld [vmem:[%s2 + $0x88] sm:$0xff]
        %v702 = vld [vmem:[%s2 + $0x90] sm:$0xff]
        %v703 = vld [vmem:[%s2 + $0x98] sm:$0xff]
        %v704 = vld [vmem:[%s2 + $0xa0] sm:$0xff]
        %v705 = vld [vmem:[%s2 + $0xa8] sm:$0xff]
        %v706 = vld [vmem:[%s2 + $0xb0] sm:$0xff]
        %v707 = vld [vmem:[%s2 + $0xb8] sm:$0xff]
        %v708 = vld [vmem:[%s2 + $0xc0] sm:$0xff]
        %v709 = vld [vmem:[%s2 + $0xc8] sm:$0xff]
        %v710 = vld [vmem:[%s2 + $0xd0] sm:$0xff]
        %v711 = vld [vmem:[%s2 + $0xd8] sm:$0xff]
        %v712 = vld [vmem:[%s2 + $0xe0] sm:$0xff]
        %v713 = vld [vmem:[%s2 + $0xe8] sm:$0xff]
        %v714 = vld [vmem:[%s2 + $0xf0] sm:$0xff]
        %v715 = vld [vmem:[%s2 + $0xf8] sm:$0xff]
        %v716 = vld [vmem:[%s2 + $0x100] sm:$0xff]
        %v717 = vld [vmem:[%s2 + $0x108] sm:$0xff]
        %v718 = vld [vmem:[%s2 + $0x110] sm:$0xff]
        %v719 = vld [vmem:[%s2 + $0x118] sm:$0xff]
        %v720 = vld [vmem:[%s2 + $0x120] sm:$0xff]
        %v721 = vld [vmem:[%s2 + $0x128] sm:$0xff]
        %v722 = vld [vmem:[%s2 + $0x130] sm:$0xff]
        %v723 = vld [vmem:[%s2 + $0x138] sm:$0xff]
        %v724 = vld [vmem:[%s2 + $0x140] sm:$0xff]
        %v725 = vld [vmem:[%s2 + $0x148] sm:$0xff]
        %v726 = vld [vmem:[%s2 + $0x150] sm:$0xff]
        %v727 = vld [vmem:[%s2 + $0x158] sm:$0xff]
        %v728 = vld [vmem:[%s2 + $0x160] sm:$0xff]
        %v729 = vld [vmem:[%s2 + $0x168] sm:$0xff]
        %v730 = vld [vmem:[%s2 + $0x170] sm:$0xff]
        %v731 = vld [vmem:[%s2 + $0x178] sm:$0xff]
        %v732 = vld [vmem:[%s2 + $0x180] sm:$0xff]
        %v733 = vmul.f32 %v635, %v684
        %v734 = vmul.f32 %v636, %v685
        %v735 = vmul.f32 %v637, %v686
        %v736 = vmul.f32 %v638, %v687
        %v737 = vmul.f32 %v639, %v688
        %v738 = vmul.f32 %v640, %v689
        %v739 = vmul.f32 %v641, %v690
        %v740 = vmul.f32 %v642, %v691
        %v741 = vmul.f32 %v643, %v692
        %v742 = vmul.f32 %v644, %v693
        %v743 = vmul.f32 %v645, %v694
        %v744 = vmul.f32 %v646, %v695
        %v745 = vmul.f32 %v647, %v696
        %v746 = vmul.f32 %v648, %v697
        %v747 = vmul.f32 %v649, %v698
        %v748 = vmul.f32 %v650, %v699
        %v749 = vmul.f32 %v651, %v700
        %v750 = vmul.f32 %v652, %v701
        %v751 = vmul.f32 %v653, %v702
        %v752 = vmul.f32 %v654, %v703
        %v753 = vmul.f32 %v655, %v704
        %v754 = vmul.f32 %v656, %v705
        %v755 = vmul.f32 %v657, %v706
        %v756 = vmul.f32 %v658, %v707
        %v757 = vmul.f32 %v659, %v708
        %v758 = vmul.f32 %v660, %v709
        %v759 = vmul.f32 %v661, %v710
        %v760 = vmul.f32 %v662, %v711
        %v761 = vmul.f32 %v663, %v712
        %v762 = vmul.f32 %v664, %v713
        %v763 = vmul.f32 %v665, %v714
        %v764 = vmul.f32 %v666, %v715
        %v765 = vmul.f32 %v667, %v716
        %v766 = vmul.f32 %v668, %v717
        %v767 = vmul.f32 %v669, %v718
        %v768 = vmul.f32 %v670, %v719
        %v769 = vmul.f32 %v671, %v720
        %v770 = vmul.f32 %v672, %v721
        %v771 = vmul.f32 %v673, %v722
        %v772 = vmul.f32 %v674, %v723
        %v773 = vmul.f32 %v675, %v724
        %v774 = vmul.f32 %v676, %v725
        %v775 = vmul.f32 %v677, %v726
        %v776 = vmul.f32 %v678, %v727
        %v777 = vmul.f32 %v679, %v728
        %v778 = vmul.f32 %v680, %v729
        %v779 = vmul.f32 %v681, %v730
        %v780 = vmul.f32 %v682, %v731
        %v781 = vmul.f32 %v683, %v732
        %v782 = vld [vmem:[%s3] sm:$0xff]
        %v783 = vld [vmem:[%s3 + $0x8] sm:$0xff]
        %v784 = vld [vmem:[%s3 + $0x10] sm:$0xff]
        %v785 = vld [vmem:[%s3 + $0x18] sm:$0xff]
        %v786 = vld [vmem:[%s3 + $0x20] sm:$0xff]
        %v787 = vld [vmem:[%s3 + $0x28] sm:$0xff]
        %v788 = vld [vmem:[%s3 + $0x30] sm:$0xff]
        %v789 = vld [vmem:[%s3 + $0x38] sm:$0xff]
        %v790 = vld [vmem:[%s3 + $0x40] sm:$0xff]
        %v791 = vld [vmem:[%s3 + $0x48] sm:$0xff]
        %v792 = vld [vmem:[%s3 + $0x50] sm:$0xff]
        %v793 = vld [vmem:[%s3 + $0x58] sm:$0xff]
        %v794 = vld [vmem:[%s3 + $0x60] sm:$0xff]
        %v795 = vld [vmem:[%s3 + $0x68] sm:$0xff]
        %v796 = vld [vmem:[%s3 + $0x70] sm:$0xff]
        %v797 = vld [vmem:[%s3 + $0x78] sm:$0xff]
        %v798 = vld [vmem:[%s3 + $0x80] sm:$0xff]
        %v799 = vld [vmem:[%s3 + $0x88] sm:$0xff]
        %v800 = vld [vmem:[%s3 + $0x90] sm:$0xff]
        %v801 = vld [vmem:[%s3 + $0x98] sm:$0xff]
        %v802 = vld [vmem:[%s3 + $0xa0] sm:$0xff]
        %v803 = vld [vmem:[%s3 + $0xa8] sm:$0xff]
        %v804 = vld [vmem:[%s3 + $0xb0] sm:$0xff]
        %v805 = vld [vmem:[%s3 + $0xb8] sm:$0xff]
        %v806 = vld [vmem:[%s3 + $0xc0] sm:$0xff]
        %v807 = vld [vmem:[%s3 + $0xc8] sm:$0xff]
        %v808 = vld [vmem:[%s3 + $0xd0] sm:$0xff]
        %v809 = vld [vmem:[%s3 + $0xd8] sm:$0xff]
        %v810 = vld [vmem:[%s3 + $0xe0] sm:$0xff]
        %v811 = vld [vmem:[%s3 + $0xe8] sm:$0xff]
        %v812 = vld [vmem:[%s3 + $0xf0] sm:$0xff]
        %v813 = vld [vmem:[%s3 + $0xf8] sm:$0xff]
        %v814 = vld [vmem:[%s3 + $0x100] sm:$0xff]
        %v815 = vld [vmem:[%s3 + $0x108] sm:$0xff]
        %v816 = vld [vmem:[%s3 + $0x110] sm:$0xff]
        %v817 = vld [vmem:[%s3 + $0x118] sm:$0xff]
        %v818 = vld [vmem:[%s3 + $0x120] sm:$0xff]
        %v819 = vld [vmem:[%s3 + $0x128] sm:$0xff]
        %v820 = vld [vmem:[%s3 + $0x130] sm:$0xff]
        %v821 = vld [vmem:[%s3 + $0x138] sm:$0xff]
        %v822 = vld [vmem:[%s3 + $0x140] sm:$0xff]
        %v823 = vld [vmem:[%s3 + $0x148] sm:$0xff]
        %v824 = vld [vmem:[%s3 + $0x150] sm:$0xff]
        %v825 = vld [vmem:[%s3 + $0x158] sm:$0xff]
        %v826 = vld [vmem:[%s3 + $0x160] sm:$0xff]
        %v827 = vld [vmem:[%s3 + $0x168] sm:$0xff]
        %v828 = vld [vmem:[%s3 + $0x170] sm:$0xff]
        %v829 = vld [vmem:[%s3 + $0x178] sm:$0xff]
        %v830 = vld [vmem:[%s3 + $0x180] sm:$0xff]
        %v831 = vadd.f32 %v733, %v782
        %v832 = vadd.f32 %v734, %v783
        %v833 = vadd.f32 %v735, %v784
        %v834 = vadd.f32 %v736, %v785
        %v835 = vadd.f32 %v737, %v786
        %v836 = vadd.f32 %v738, %v787
        %v837 = vadd.f32 %v739, %v788
        %v838 = vadd.f32 %v740, %v789
        %v839 = vadd.f32 %v741, %v790
        %v840 = vadd.f32 %v742, %v791
        %v841 = vadd.f32 %v743, %v792
        %v842 = vadd.f32 %v744, %v793
        %v843 = vadd.f32 %v745, %v794
        %v844 = vadd.f32 %v746, %v795
        %v845 = vadd.f32 %v747, %v796
        %v846 = vadd.f32 %v748, %v797
        %v847 = vadd.f32 %v749, %v798
        %v848 = vadd.f32 %v750, %v799
        %v849 = vadd.f32 %v751, %v800
        %v850 = vadd.f32 %v752, %v801
        %v851 = vadd.f32 %v753, %v802
        %v852 = vadd.f32 %v754, %v803
        %v853 = vadd.f32 %v755, %v804
        %v854 = vadd.f32 %v756, %v805
        %v855 = vadd.f32 %v757, %v806
        %v856 = vadd.f32 %v758, %v807
        %v857 = vadd.f32 %v759, %v808
        %v858 = vadd.f32 %v760, %v809
        %v859 = vadd.f32 %v761, %v810
        %v860 = vadd.f32 %v762, %v811
        %v861 = vadd.f32 %v763, %v812
        %v862 = vadd.f32 %v764, %v813
        %v863 = vadd.f32 %v765, %v814
        %v864 = vadd.f32 %v766, %v815
        %v865 = vadd.f32 %v767, %v816
        %v866 = vadd.f32 %v768, %v817
        %v867 = vadd.f32 %v769, %v818
        %v868 = vadd.f32 %v770, %v819
        %v869 = vadd.f32 %v771, %v820
        %v870 = vadd.f32 %v772, %v821
        %v871 = vadd.f32 %v773, %v822
        %v872 = vadd.f32 %v774, %v823
        %v873 = vadd.f32 %v775, %v824
        %v874 = vadd.f32 %v776, %v825
        %v875 = vadd.f32 %v777, %v826
        %v876 = vadd.f32 %v778, %v827
        %v877 = vadd.f32 %v779, %v828
        %v878 = vadd.f32 %v780, %v829
        %v879 = vadd.f32 %v781, %v830
        %880 = vst [vmem:[%s211] sm:$0xff] %v831
        %881 = vst [vmem:[%s211 + $0x8] sm:$0xff] %v832
        %882 = vst [vmem:[%s211 + $0x10] sm:$0xff] %v833
        %883 = vst [vmem:[%s211 + $0x18] sm:$0xff] %v834
        %884 = vst [vmem:[%s211 + $0x20] sm:$0xff] %v835
        %885 = vst [vmem:[%s211 + $0x28] sm:$0xff] %v836
        %886 = vst [vmem:[%s211 + $0x30] sm:$0xff] %v837
        %887 = vst [vmem:[%s211 + $0x38] sm:$0xff] %v838
        %888 = vst [vmem:[%s211 + $0x40] sm:$0xff] %v839
        %889 = vst [vmem:[%s211 + $0x48] sm:$0xff] %v840
        %890 = vst [vmem:[%s211 + $0x50] sm:$0xff] %v841
        %891 = vst [vmem:[%s211 + $0x58] sm:$0xff] %v842
        %892 = vst [vmem:[%s211 + $0x60] sm:$0xff] %v843
        %893 = vst [vmem:[%s211 + $0x68] sm:$0xff] %v844
        %894 = vst [vmem:[%s211 + $0x70] sm:$0xff] %v845
        %895 = vst [vmem:[%s211 + $0x78] sm:$0xff] %v846
        %896 = vst [vmem:[%s211 + $0x80] sm:$0xff] %v847
        %897 = vst [vmem:[%s211 + $0x88] sm:$0xff] %v848
        %898 = vst [vmem:[%s211 + $0x90] sm:$0xff] %v849
        %899 = vst [vmem:[%s211 + $0x98] sm:$0xff] %v850
        %900 = vst [vmem:[%s211 + $0xa0] sm:$0xff] %v851
        %901 = vst [vmem:[%s211 + $0xa8] sm:$0xff] %v852
        %902 = vst [vmem:[%s211 + $0xb0] sm:$0xff] %v853
        %903 = vst [vmem:[%s211 + $0xb8] sm:$0xff] %v854
        %904 = vst [vmem:[%s211 + $0xc0] sm:$0xff] %v855
        %905 = vst [vmem:[%s211 + $0xc8] sm:$0xff] %v856
        %906 = vst [vmem:[%s211 + $0xd0] sm:$0xff] %v857
        %907 = vst [vmem:[%s211 + $0xd8] sm:$0xff] %v858
        %908 = vst [vmem:[%s211 + $0xe0] sm:$0xff] %v859
        %909 = vst [vmem:[%s211 + $0xe8] sm:$0xff] %v860
        %910 = vst [vmem:[%s211 + $0xf0] sm:$0xff] %v861
        %911 = vst [vmem:[%s211 + $0xf8] sm:$0xff] %v862
        %912 = vst [vmem:[%s211 + $0x100] sm:$0xff] %v863
        %913 = vst [vmem:[%s211 + $0x108] sm:$0xff] %v864
        %914 = vst [vmem:[%s211 + $0x110] sm:$0xff] %v865
        %915 = vst [vmem:[%s211 + $0x118] sm:$0xff] %v866
        %916 = vst [vmem:[%s211 + $0x120] sm:$0xff] %v867
        %917 = vst [vmem:[%s211 + $0x128] sm:$0xff] %v868
        %918 = vst [vmem:[%s211 + $0x130] sm:$0xff] %v869
        %919 = vst [vmem:[%s211 + $0x138] sm:$0xff] %v870
        %920 = vst [vmem:[%s211 + $0x140] sm:$0xff] %v871
        %921 = vst [vmem:[%s211 + $0x148] sm:$0xff] %v872
        %922 = vst [vmem:[%s211 + $0x150] sm:$0xff] %v873
        %923 = vst [vmem:[%s211 + $0x158] sm:$0xff] %v874
        %924 = vst [vmem:[%s211 + $0x160] sm:$0xff] %v875
        %925 = vst [vmem:[%s211 + $0x168] sm:$0xff] %v876
        %926 = vst [vmem:[%s211 + $0x170] sm:$0xff] %v877
        %927 = vst [vmem:[%s211 + $0x178] sm:$0xff] %v878
        %928 = vst [vmem:[%s211 + $0x180] sm:$0xff] %v879
        %p929 = scmp.lt.s32.totalorder %s16, 1
        %s930 = scalar_select %p929, %s16, 1
        %s931 = smul.addr %s930, 49
        %s932 = smul.addr %s931, 8
        %s933 = scalar_lea.vmem %s4, %s932
        // Predicated region
        $region41: #{submodel_forward.1} parent=35 // pred_check
          %p934 = pneg %p123
        $region42: #{submodel_forward.1} parent=35 // pred_check_branch
          %936 = sbr.rel (%p934) target = $region44
        $region43: #{submodel_forward.1} parent=35 // pred_region
          _
        $region44: #{submodel_forward.1} parent=35 // pred_fallthru
          _
      $region36: #{submodel_forward.1} parent=5 // pred_fallthru
        _
      %p937 = scmp.le.s32.totalorder 2, %s11
      // Predicated region
      $region45: #{submodel_forward.1} parent=5 // pred_check
        %p938 = pneg %p937
      $region46: #{submodel_forward.1} parent=5 // pred_check_branch
        %940 = sbr.rel (%p938) target = $region48
      $region47: #{submodel_forward.1} parent=5 // pred_region
        %s941 = ssub.s32 %s11, 2
        // Predicated region
        $region49: #{submodel_forward.1} parent=47 // pred_check
          %p942 = pneg %p129
        $region50: #{submodel_forward.1} parent=47 // pred_check_branch
          %944 = sbr.rel (%p942) target = $region52
        $region51: #{submodel_forward.1} parent=47 // pred_region
          %p945 = scmp.lt.s32.totalorder %s17, 1
          %s946 = scalar_select %p945, %s17, 1
          %s947 = smul.addr %s946, 49
          %s948 = smul.addr %s947, 8
          %s949 = scalar_lea.vmem %s4, %s948
        $region52: #{submodel_forward.1} parent=47 // pred_fallthru
          _
      $region48: #{submodel_forward.1} parent=5 // pred_fallthru
        _
    $region6: #{submodel_forward.1} parent=1 // loop_footer
      %s15 = sadd.s32 1, %s11
    $region7: #{submodel_forward.1} parent=1 // loop_footer_branch
      %10 = sbr.rel target = $region3
    $region8: #{submodel_forward.1} parent=1 // loop_exit
      _
    %950 = vsyncpa [#allocation3], 1
    %s951 = scalar_lea.sflag [#allocation3], 1
    %952 = vsyncpa %s951, 1

</llo_original>
